<compile_context>
chip_gen: v5e
topology: v5e:2x2
jax: 0.10.0
libtpu: 0.0.40
codegen_flags: <defaults>
</compile_context>

<pallas_src>
import math
import numpy as np

import jax
import jax.numpy as jnp
from jax import lax
from jax.experimental import pallas as pl
from jax.experimental.pallas import tpu as pltpu

LN_EPS = 1e-12
ACT_DTYPE = jnp.bfloat16            # HBM storage + MXU input format
VMEM_LIMIT = 48 * 1024 * 1024       # headroom below v7x's 64 MiB physical VMEM


def _gelu(x):
    # tanh-approximation GELU (BERT/ERNIE gelu) in f32.
    return 0.5 * x * (1.0 + jnp.tanh(0.7978845608028654 * (x + 0.044715 * x * x * x)))


def _layernorm(h, g, b):
    mean = jnp.mean(h, axis=-1, keepdims=True)
    var = jnp.mean(jnp.square(h - mean), axis=-1, keepdims=True)
    return (h - mean) * lax.rsqrt(var + LN_EPS) * g + b


def _pick_tile(dim, target, mult):
    """Largest tile <= target that divides `dim` and is a multiple of `mult`;
    falls back to the full dim (which always satisfies Mosaic's (8,128) rule)."""
    if dim <= target:
        return dim
    t = (target // mult) * mult
    while t >= mult:
        if dim % t == 0:
            return t
        t -= mult
    return dim


def _cparams(*sem):
    return pltpu.CompilerParams(dimension_semantics=sem, vmem_limit_bytes=VMEM_LIMIT)


# ----------------------------- Pallas kernels -----------------------------

def pallas_matmul(x, w, b, act=None, out_dtype=None):
    """Tiled (M,K)@(K,N)+b with optional activation. bf16 MXU inputs, f32 accumulate."""
    M, K = x.shape
    N = w.shape[1]
    out_dtype = out_dtype if out_dtype is not None else x.dtype
    tm = _pick_tile(M, 256, 8)
    tn = _pick_tile(N, 256, 128)
    tk = _pick_tile(K, 512, 128)
    gm, gn, gk = M // tm, N // tn, K // tk

    def kernel(x_ref, w_ref, b_ref, o_ref, acc_ref):
        @pl.when(pl.program_id(2) == 0)
        def _():
            acc_ref[...] = jnp.zeros_like(acc_ref)

        acc_ref[...] += jnp.dot(x_ref[...], w_ref[...],
                                preferred_element_type=jnp.float32)

        @pl.when(pl.program_id(2) == gk - 1)
        def _():
            acc = acc_ref[...] + b_ref[...].astype(jnp.float32)
            if act is not None:
                acc = act(acc)
            o_ref[...] = acc.astype(o_ref.dtype)

    return pl.pallas_call(
        kernel,
        out_shape=jax.ShapeDtypeStruct((M, N), out_dtype),
        grid=(gm, gn, gk),
        in_specs=[pl.BlockSpec((tm, tk), lambda i, j, k: (i, k)),
                  pl.BlockSpec((tk, tn), lambda i, j, k: (k, j)),
                  pl.BlockSpec((1, tn), lambda i, j, k: (0, j))],
        out_specs=pl.BlockSpec((tm, tn), lambda i, j, k: (i, j)),
        scratch_shapes=[pltpu.VMEM((tm, tn), jnp.float32)],
        compiler_params=_cparams("parallel", "parallel", "arbitrary"),
    )(x, w, b.reshape(1, N))


def pallas_matmul_residual_layernorm(x, w, b, res, gamma, beta):
    """LayerNorm((x @ w + b) + res) over last dim; tiled over M and K, full N
    (the LN reduction needs the whole row)."""
    M, K = x.shape
    N = w.shape[1]
    tm = _pick_tile(M, 256, 8)
    tk = _pick_tile(K, 512, 128)
    gm, gk = M // tm, K // tk

    def kernel(x_ref, w_ref, b_ref, r_ref, g_ref, be_ref, o_ref, acc_ref):
        @pl.when(pl.program_id(1) == 0)
        def _():
            acc_ref[...] = jnp.zeros_like(acc_ref)

        acc_ref[...] += jnp.dot(x_ref[...], w_ref[...],
                                preferred_element_type=jnp.float32)

        @pl.when(pl.program_id(1) == gk - 1)
        def _():
            h = (acc_ref[...] + b_ref[...].astype(jnp.float32)
                 + r_ref[...].astype(jnp.float32))
            o_ref[...] = _layernorm(h, g_ref[...].astype(jnp.float32),
                                    be_ref[...].astype(jnp.float32)).astype(o_ref.dtype)

    row = pl.BlockSpec((tm, N), lambda i, k: (i, 0))
    vec = pl.BlockSpec((1, N), lambda i, k: (0, 0))
    return pl.pallas_call(
        kernel,
        out_shape=jax.ShapeDtypeStruct((M, N), x.dtype),
        grid=(gm, gk),
        in_specs=[pl.BlockSpec((tm, tk), lambda i, k: (i, k)),
                  pl.BlockSpec((tk, N), lambda i, k: (k, 0)),
                  vec, row, vec, vec],
        out_specs=row,
        scratch_shapes=[pltpu.VMEM((tm, N), jnp.float32)],
        compiler_params=_cparams("parallel", "arbitrary"),
    )(x, w, b.reshape(1, N), res, gamma.reshape(1, N), beta.reshape(1, N))


def pallas_dual_matmul_gelu(x, e, wx, we, b):
    """gelu(x @ wx + e @ we + b) — ERNIE token/entity fusion into the intermediate."""
    M, K = x.shape
    N = wx.shape[1]
    tm = _pick_tile(M, 256, 8)
    tn = _pick_tile(N, 256, 128)
    tk = _pick_tile(K, 512, 128)
    gm, gn, gk = M // tm, N // tn, K // tk

    def kernel(x_ref, e_ref, wx_ref, we_ref, b_ref, o_ref, acc_ref):
        @pl.when(pl.program_id(2) == 0)
        def _():
            acc_ref[...] = jnp.zeros_like(acc_ref)

        acc_ref[...] += jnp.dot(x_ref[...], wx_ref[...],
                                preferred_element_type=jnp.float32)
        acc_ref[...] += jnp.dot(e_ref[...], we_ref[...],
                                preferred_element_type=jnp.float32)

        @pl.when(pl.program_id(2) == gk - 1)
        def _():
            o_ref[...] = _gelu(acc_ref[...]
                               + b_ref[...].astype(jnp.float32)).astype(o_ref.dtype)

    return pl.pallas_call(
        kernel,
        out_shape=jax.ShapeDtypeStruct((M, N), x.dtype),
        grid=(gm, gn, gk),
        in_specs=[pl.BlockSpec((tm, tk), lambda i, j, k: (i, k)),
                  pl.BlockSpec((tm, tk), lambda i, j, k: (i, k)),
                  pl.BlockSpec((tk, tn), lambda i, j, k: (k, j)),
                  pl.BlockSpec((tk, tn), lambda i, j, k: (k, j)),
                  pl.BlockSpec((1, tn), lambda i, j, k: (0, j))],
        out_specs=pl.BlockSpec((tm, tn), lambda i, j, k: (i, j)),
        scratch_shapes=[pltpu.VMEM((tm, tn), jnp.float32)],
        compiler_params=_cparams("parallel", "parallel", "arbitrary"),
    )(x, e, wx, we, b.reshape(1, N))


def pallas_dual_ffn_output(inter, w1, b1, res1, g1, be1, w2, b2, res2, g2, be2):
    """(LN(inter @ w1 + b1 + res1), LN(inter @ w2 + b2 + res2)).
    Both output streams share the `inter` (M, 4D) input, which is read from HBM once."""
    M, K = inter.shape
    N = w1.shape[1]
    tm = _pick_tile(M, 256, 8)
    tk = _pick_tile(K, 512, 128)
    gm, gk = M // tm, K // tk

    def kernel(x_ref, w1_ref, b1_ref, r1_ref, g1_ref, be1_ref,
               w2_ref, b2_ref, r2_ref, g2_ref, be2_ref,
               o1_ref, o2_ref, acc1_ref, acc2_ref):
        @pl.when(pl.program_id(1) == 0)
        def _():
            acc1_ref[...] = jnp.zeros_like(acc1_ref)
            acc2_ref[...] = jnp.zeros_like(acc2_ref)

        xb = x_ref[...]
        acc1_ref[...] += jnp.dot(xb, w1_ref[...], preferred_element_type=jnp.float32)
        acc2_ref[...] += jnp.dot(xb, w2_ref[...], preferred_element_type=jnp.float32)

        @pl.when(pl.program_id(1) == gk - 1)
        def _():
            h1 = (acc1_ref[...] + b1_ref[...].astype(jnp.float32)
                  + r1_ref[...].astype(jnp.float32))
            o1_ref[...] = _layernorm(h1, g1_ref[...].astype(jnp.float32),
                                     be1_ref[...].astype(jnp.float32)).astype(o1_ref.dtype)
            h2 = (acc2_ref[...] + b2_ref[...].astype(jnp.float32)
                  + r2_ref[...].astype(jnp.float32))
            o2_ref[...] = _layernorm(h2, g2_ref[...].astype(jnp.float32),
                                     be2_ref[...].astype(jnp.float32)).astype(o2_ref.dtype)

    row = pl.BlockSpec((tm, N), lambda i, k: (i, 0))
    vec = pl.BlockSpec((1, N), lambda i, k: (0, 0))
    wsp = pl.BlockSpec((tk, N), lambda i, k: (k, 0))
    return pl.pallas_call(
        kernel,
        out_shape=(jax.ShapeDtypeStruct((M, N), inter.dtype),
                   jax.ShapeDtypeStruct((M, N), inter.dtype)),
        grid=(gm, gk),
        in_specs=[pl.BlockSpec((tm, tk), lambda i, k: (i, k)),
                  wsp, vec, row, vec, vec,
                  wsp, vec, row, vec, vec],
        out_specs=(row, row),
        scratch_shapes=[pltpu.VMEM((tm, N), jnp.float32),
                        pltpu.VMEM((tm, N), jnp.float32)],
        compiler_params=_cparams("parallel", "arbitrary"),
    )(inter, w1, b1.reshape(1, N), res1, g1.reshape(1, N), be1.reshape(1, N),
      w2, b2.reshape(1, N), res2, g2.reshape(1, N), be2.reshape(1, N))


def pallas_layernorm(x, gamma, beta, res=None):
    """LayerNorm(x [+ res]) over the last dim, tiled over rows, f32 math."""
    M, N = x.shape
    tm = _pick_tile(M, 512, 8)
    gm = M // tm

    def kernel(*refs):
        if res is not None:
            x_ref, r_ref, g_ref, b_ref, o_ref = refs
            h = x_ref[...].astype(jnp.float32) + r_ref[...].astype(jnp.float32)
        else:
            x_ref, g_ref, b_ref, o_ref = refs
            h = x_ref[...].astype(jnp.float32)
        o_ref[...] = _layernorm(h, g_ref[...].astype(jnp.float32),
                                b_ref[...].astype(jnp.float32)).astype(o_ref.dtype)

    row = pl.BlockSpec((tm, N), lambda i: (i, 0))
    vec = pl.BlockSpec((1, N), lambda i: (0, 0))
    if res is not None:
        in_specs = [row, row, vec, vec]
        args = (x, res, gamma.reshape(1, N), beta.reshape(1, N))
    else:
        in_specs = [row, vec, vec]
        args = (x, gamma.reshape(1, N), beta.reshape(1, N))
    return pl.pallas_call(
        kernel,
        out_shape=jax.ShapeDtypeStruct((M, N), x.dtype),
        grid=(gm,),
        in_specs=in_specs,
        out_specs=row,
        compiler_params=_cparams("parallel"),
    )(*args)


def pallas_attention_fused(qkv, n_heads, scale):
    """Multi-head self-attention.  qkv: (B, L, 3D) with column layout [Q | K | V],
    each split into `n_heads` contiguous Dh blocks.  All heads of one batch element
    are processed per grid step and the context is written lane-dense as (B, L, D),
    so no XLA reshape/transpose round-trips are needed.  attention_mask is None in
    the reference call, so no masking is applied."""
    B, L, D3 = qkv.shape
    D = D3 // 3
    Dh = D // n_heads

    def kernel(qkv_ref, o_ref):
        for h in range(n_heads):            # static unroll over heads
            q = qkv_ref[0, :, h * Dh:(h + 1) * Dh]                       # (L, Dh) bf16
            k = qkv_ref[0, :, D + h * Dh:D + (h + 1) * Dh]
            v = qkv_ref[0, :, 2 * D + h * Dh:2 * D + (h + 1) * Dh]
            s = lax.dot_general(q, k, (((1,), (1,)), ((), ())),
                                preferred_element_type=jnp.float32) * scale   # (L, L) f32
            s = s - jnp.max(s, axis=-1, keepdims=True)
            p = jnp.exp(s)
            p = p * pl.reciprocal(jnp.sum(p, axis=-1, keepdims=True), approx=True)
            ctx = jnp.dot(p.astype(v.dtype), v, preferred_element_type=jnp.float32)
            o_ref[0, :, h * Dh:(h + 1) * Dh] = ctx.astype(o_ref.dtype)

    return pl.pallas_call(
        kernel,
        out_shape=jax.ShapeDtypeStruct((B, L, D), qkv.dtype),
        grid=(B,),
        in_specs=[pl.BlockSpec((1, L, D3), lambda b: (b, 0, 0))],
        out_specs=pl.BlockSpec((1, L, D), lambda b: (b, 0, 0)),
        compiler_params=_cparams("parallel"),
    )(qkv)


# ----------------------------- model -----------------------------

def init_params(key, *, D, H, n_layers, role_vocab, max_pos, dtype=ACT_DTYPE):
    n_inter = 4 * D                                  # config.intermediate_size = 4 * dim
    keys = iter(jax.random.split(key, 16 * n_layers + 16))

    def w(shape):                                    # matmul weights stored bf16 (MXU fmt)
        return (0.02 * jax.random.normal(next(keys), shape, jnp.float32)).astype(dtype)

    def f32w(shape):
        return 0.02 * jax.random.normal(next(keys), shape, jnp.float32)

    def ones(n):  return jnp.ones((n,), jnp.float32)
    def zeros(n): return jnp.zeros((n,), jnp.float32)

    params = {
        "n_heads": H,
        "role_embed": f32w((role_vocab, D)),         # role_embed embedding table
        "pos_emb": f32w((max_pos, D)),
        "tok_emb": f32w((2, D)),
        "emb_ln_g": ones(D), "emb_ln_b": zeros(D),
        "Wt": w((D, D)), "bt": zeros(D),             # entity-prediction head transform
        "head_ln_g": ones(D), "head_ln_b": zeros(D),
        "layers": [],
    }
    for _ in range(n_layers):
        params["layers"].append({
            # fused QKV columns laid out as [Q heads | K heads | V heads]
            "Wqkv": w((D, 3 * D)), "bqkv": zeros(3 * D),
            "Wo": w((D, D)), "bo": zeros(D), "ln1_g": ones(D), "ln1_b": zeros(D),
            "Wed": w((D, D)), "bed": zeros(D), "lne1_g": ones(D), "lne1_b": zeros(D),
            "Wi": w((D, n_inter)), "Wei": w((D, n_inter)), "bi": zeros(n_inter),
            "Wo2": w((n_inter, D)), "bo2": zeros(D), "ln2_g": ones(D), "ln2_b": zeros(D),
            "Weo2": w((n_inter, D)), "beo2": zeros(D), "lne2_g": ones(D), "lne2_b": zeros(D),
        })
    return params


def turn_level_encoder_forward(params, x, x_role, compute_role_ae_loss=False):
    """x: (B, L, D) float32, x_role: (B, L) int32.  Returns (sequence_output, role_ae_loss)."""
    B, L, D = x.shape
    M = B * L
    H = params["n_heads"]
    Dh = D // H
    scale = 1.0 / math.sqrt(Dh)
    act_dtype = params["layers"][0]["Wqkv"].dtype

    # In the reference ('USE_ENTMASK' absent): mask = ones_like(x_role) -> the
    # per-layer `* mask` multiplies are identity and are dropped (dead HBM passes).

    # ---- embeddings: input_embedding + position + token_type(0), LayerNorm ----
    pos_tok = (params["pos_emb"][:L] + params["tok_emb"][0]).astype(act_dtype)   # (L, D)
    res = jnp.broadcast_to(pos_tok[None], (B, L, D)).reshape(M, D)
    h = pallas_layernorm(x.reshape(M, D).astype(act_dtype),
                         params["emb_ln_g"], params["emb_ln_b"], res=res)

    # entity (role) stream input: role_embed(x_role)
    ent = params["role_embed"][x_role].reshape(M, D).astype(act_dtype)

    for lp in params["layers"]:
        # fused QKV projection; attention slices Q/K/V straight out of the
        # (B, L, 3D) layout (no XLA reshape/transpose round-trips).
        qkv = pallas_matmul(h, lp["Wqkv"], lp["bqkv"])                        # (M, 3D)
        ctx = pallas_attention_fused(qkv.reshape(B, L, 3 * D), H, scale)      # (B, L, D)
        attn_out = pallas_matmul_residual_layernorm(
            ctx.reshape(M, D), lp["Wo"], lp["bo"], h, lp["ln1_g"], lp["ln1_b"])

        # entity (role) stream.
        # TODO(synk): ERNIE's BertAttention_simple over entities is simplified to a
        # per-token dense + residual layernorm (BertForPreTraining source not provided).
        ent_out = pallas_matmul_residual_layernorm(
            ent, lp["Wed"], lp["bed"], ent, lp["lne1_g"], lp["lne1_b"])

        # fused intermediate (token + entity fusion), then both output streams in a
        # single kernel that reads `inter` from HBM once.
        inter = pallas_dual_matmul_gelu(attn_out, ent_out, lp["Wi"], lp["Wei"], lp["bi"])
        h, ent = pallas_dual_ffn_output(
            inter, lp["Wo2"], lp["bo2"], attn_out, lp["ln2_g"], lp["ln2_b"],
            lp["Weo2"], lp["beo2"], ent_out, lp["lne2_g"], lp["lne2_b"])

    sequence_output = h.astype(x.dtype).reshape(B, L, D)

    # ---- entity (role) prediction head -> role AE loss ----
    # The reference multiplies role_ae_loss by 0 ('USE_ENTMASK' not in opt), so the
    # whole head (3 matmuls + logsumexp + the host-side np.unique/dict remap that
    # would stall dispatch) is dead compute; it is gated off by default and the
    # returned value (0.0) is identical to the reference output.
    if compute_role_ae_loss:
        role_tab = params["role_embed"]
        x_role_np = np.asarray(x_role)                       # host glue as in reference
        uniq_idx = np.unique(x_role_np)
        ent_candidate = role_tab[jnp.asarray(uniq_idx + 1)]  # role_embed(uniq_idx + 1)
        remap = {int(v): i for i, v in enumerate(uniq_idx)}
        remap[-1] = -1
        labels = jnp.asarray(np.vectorize(lambda v: remap[int(v)])(x_role_np)
                             .astype(np.int32)).reshape(M)
        trans = pallas_matmul(h, params["Wt"], params["bt"], act=_gelu)
        trans = pallas_layernorm(trans, params["head_ln_g"], params["head_ln_b"])
        n_cand = ent_candidate.shape[0]
        scores = pallas_matmul(trans, ent_candidate.T.astype(act_dtype),
                               jnp.zeros((n_cand,), jnp.float32),
                               out_dtype=jnp.float32)        # (M, n_cand)
        logz = jax.scipy.special.logsumexp(scores, axis=-1)
        picked = jnp.take_along_axis(scores, jnp.clip(labels, 0)[:, None], axis=-1)[:, 0]
        valid = labels >= 0                                  # ignore_index = -1
        n_valid = jnp.maximum(jnp.sum(valid), 1)
        ce = -jnp.sum(jnp.where(valid, picked - logz, 0.0)) / n_valid
        role_ae_loss = 0.0 * ce
    else:
        role_ae_loss = jnp.zeros((), jnp.float32)

    return sequence_output, role_ae_loss


if __name__ == "__main__":
    B, L, D, H, n_layers = 2, 8, 32, 4, 2
    role_vocab = 48                                   # role embedding table size

    key = jax.random.PRNGKey(0)
    kp, kx, kr = jax.random.split(key, 3)
    params = init_params(kp, D=D, H=H, n_layers=n_layers,
                         role_vocab=role_vocab, max_pos=L)

    x = jax.random.normal(kx, (B, L, D), jnp.float32)                 # batch x len x n_state
    x_role = jax.random.randint(kr, (B, L), 0, 10, jnp.int32)         # role ids

    seq_out, role_ae_loss = turn_level_encoder_forward(params, x, x_role)
    jax.block_until_ready(seq_out)
    jax.block_until_ready(role_ae_loss)

    assert seq_out.shape == (B, L, D)
    assert role_ae_loss.shape == ()
    assert bool(jnp.all(jnp.isfinite(seq_out)))
    print("KERNEL_OK")
</pallas_src>

<mosaic_0001>
module attributes {stable_mosaic.version = 11 : i64} {
  func.func @kernel(%arg0: i32, %arg1: memref<16x32xbf16, #tpu.memory_space<vmem>>, %arg2: memref<16x32xbf16, #tpu.memory_space<vmem>>, %arg3: memref<1x32xf32, #tpu.memory_space<vmem>>, %arg4: memref<1x32xf32, #tpu.memory_space<vmem>>, %arg5: memref<16x32xbf16, #tpu.memory_space<vmem>>) attributes {dimension_semantics = [#tpu.dimension_semantics<parallel>], iteration_bounds = array<i64: 1>, scalar_prefetch = 0 : i64, scratch_operands = 0 : i64, tpu.core_type = #tpu.core_type<tc>, window_params = [{transform_indices = @transform_0, window_bounds = array<i64: 16, 32>}, {transform_indices = @transform_1, window_bounds = array<i64: 16, 32>}, {pipeline_mode = #tpu.pipeline_mode<synchronous>, transform_indices = @transform_2, window_bounds = array<i64: 1, 32>}, {pipeline_mode = #tpu.pipeline_mode<synchronous>, transform_indices = @transform_3, window_bounds = array<i64: 1, 32>}, {transform_indices = @transform_4, window_bounds = array<i64: 16, 32>}]} {
    %c0 = arith.constant 0 : index
    %c0_0 = arith.constant 0 : index
    %0 = vector.load %arg1[%c0, %c0_0] : memref<16x32xbf16, #tpu.memory_space<vmem>>, vector<16x32xbf16>
    %1 = arith.extf %0 : vector<16x32xbf16> to vector<16x32xf32>
    %c0_1 = arith.constant 0 : index
    %c0_2 = arith.constant 0 : index
    %2 = vector.load %arg2[%c0_1, %c0_2] : memref<16x32xbf16, #tpu.memory_space<vmem>>, vector<16x32xbf16>
    %3 = arith.extf %2 : vector<16x32xbf16> to vector<16x32xf32>
    %4 = arith.addf %1, %3 : vector<16x32xf32>
    %c0_3 = arith.constant 0 : index
    %c0_4 = arith.constant 0 : index
    %5 = vector.load %arg3[%c0_3, %c0_4] : memref<1x32xf32, #tpu.memory_space<vmem>>, vector<1x32xf32>
    %c0_5 = arith.constant 0 : index
    %c0_6 = arith.constant 0 : index
    %6 = vector.load %arg4[%c0_5, %c0_6] : memref<1x32xf32, #tpu.memory_space<vmem>>, vector<1x32xf32>
    %cst = arith.constant dense<0.000000e+00> : vector<16xf32>
    %7 = vector.multi_reduction <add>, %4, %cst [1] : vector<16x32xf32> to vector<16xf32>
    %8 = vector.shape_cast %7 : vector<16xf32> to vector<16x1xf32>
    %cst_7 = arith.constant 3.200000e+01 : f32
    %9 = vector.broadcast %cst_7 : f32 to vector<16x1xf32>
    %10 = arith.divf %8, %9 : vector<16x1xf32>
    %11 = vector.broadcast %10 : vector<16x1xf32> to vector<16x32xf32>
    %12 = arith.subf %4, %11 : vector<16x32xf32>
    %13 = arith.mulf %12, %12 : vector<16x32xf32>
    %cst_8 = arith.constant dense<0.000000e+00> : vector<16xf32>
    %14 = vector.multi_reduction <add>, %13, %cst_8 [1] : vector<16x32xf32> to vector<16xf32>
    %15 = vector.shape_cast %14 : vector<16xf32> to vector<16x1xf32>
    %cst_9 = arith.constant 3.200000e+01 : f32
    %16 = vector.broadcast %cst_9 : f32 to vector<16x1xf32>
    %17 = arith.divf %15, %16 : vector<16x1xf32>
    %18 = vector.broadcast %10 : vector<16x1xf32> to vector<16x32xf32>
    %19 = arith.subf %4, %18 : vector<16x32xf32>
    %cst_10 = arith.constant 9.99999996E-13 : f32
    %20 = vector.broadcast %cst_10 : f32 to vector<16x1xf32>
    %21 = arith.addf %17, %20 : vector<16x1xf32>
    %22 = math.rsqrt %21 : vector<16x1xf32>
    %23 = vector.broadcast %22 : vector<16x1xf32> to vector<16x32xf32>
    %24 = arith.mulf %19, %23 : vector<16x32xf32>
    %25 = vector.broadcast %5 : vector<1x32xf32> to vector<16x32xf32>
    %26 = arith.mulf %24, %25 : vector<16x32xf32>
    %27 = vector.broadcast %6 : vector<1x32xf32> to vector<16x32xf32>
    %28 = arith.addf %26, %27 : vector<16x32xf32>
    %29 = arith.truncf %28 : vector<16x32xf32> to vector<16x32xbf16>
    %c0_11 = arith.constant 0 : index
    %c0_12 = arith.constant 0 : index
    %30 = vector.load %arg5[%c0_11, %c0_12] : memref<16x32xbf16, #tpu.memory_space<vmem>>, vector<16x32xbf16>
    tpu.vector_store %arg5[%c0_11, %c0_12], %29 {strides = array<i32>} : memref<16x32xbf16, #tpu.memory_space<vmem>>, vector<16x32xbf16>,
    return
  }
  func.func @transform_0(%arg0: i32) -> (i32, i32) {
    %c0_i32 = arith.constant 0 : i32
    %c0_i32_0 = arith.constant 0 : i32
    return %arg0, %c0_i32 : i32, i32
  }
  func.func @transform_1(%arg0: i32) -> (i32, i32) {
    %c0_i32 = arith.constant 0 : i32
    %c0_i32_0 = arith.constant 0 : i32
    return %arg0, %c0_i32 : i32, i32
  }
  func.func @transform_2(%arg0: i32) -> (i32, i32) {
    %c0_i32 = arith.constant 0 : i32
    %c0_i32_0 = arith.constant 0 : i32
    %c0_i32_1 = arith.constant 0 : i32
    return %c0_i32, %c0_i32_0 : i32, i32
  }
  func.func @transform_3(%arg0: i32) -> (i32, i32) {
    %c0_i32 = arith.constant 0 : i32
    %c0_i32_0 = arith.constant 0 : i32
    %c0_i32_1 = arith.constant 0 : i32
    return %c0_i32, %c0_i32_0 : i32, i32
  }
  func.func @transform_4(%arg0: i32) -> (i32, i32) {
    %c0_i32 = arith.constant 0 : i32
    %c0_i32_0 = arith.constant 0 : i32
    return %arg0, %c0_i32 : i32, i32
  }
}

</mosaic_0001>

<llo_original>
// kernel: tpu_custom_call.1
$region0: #{tpu_custom_call.1}
  #allocation0 [shape = 'u32[]', space=smem, size = 0x4, offset = 0x4, fixed_abs, tag = 'smem constant byte address 0x4 - core index']
  #allocation1 [shape = 'u32[72,128]{1,0:T(1,128)}', space=vmem, size = 0x9000, scoped, tag = 'internal scratch']
  %s0 = inlined_call_operand.hbm [shape: bf16[16,32], index: 0, kind: input, shape index: {}]
  %s1 = inlined_call_operand.hbm [shape: bf16[16,32], index: 1, kind: input, shape index: {}]
  %s2 = inlined_call_operand.vmem [shape: f32[1,32], index: 2, kind: input, shape index: {}]
  %s3 = inlined_call_operand.vmem [shape: f32[1,32], index: 3, kind: input, shape index: {}]
  %s4 = inlined_call_operand.hbm [shape: bf16[16,32], index: 4, kind: output, shape index: {}]
  %s5 = sld [smem:[#allocation0]]
  $region34: #{tpu_custom_call.1} parent=0
    _
  %s7 = ssub.s32 1, %s5
  %s8 = scalar_select 0, %s7, %s5
  $region1: #{tpu_custom_call.1} parent=0
    #allocation2 [shape = 'u8[4096]{0}', space=vmem, size = 0x1000, scoped, tag = 'input window, operand 0, single buffered']
    #allocation3 [shape = 's32[1]{0}', space=sflag, size = 0x4, scoped, tag = 'scoped memory for tpu_custom_call.1']
    #allocation4 [shape = 's32[1]{0}', space=sflag, size = 0x4, scoped, tag = 'scoped memory for tpu_custom_call.1']
    #allocation5 [shape = 'u8[4096]{0}', space=vmem, size = 0x1000, scoped, tag = 'input window, operand 1, single buffered']
    #allocation6 [shape = 's32[1]{0}', space=sflag, size = 0x4, scoped, tag = 'scoped memory for tpu_custom_call.1']
    #allocation7 [shape = 'u8[4096]{0}', space=vmem, size = 0x1000, scoped, tag = 'output window, operand 0, single buffered']
    %9 = vsyncpa [#allocation3], 0
    %10 = vsyncpa [#allocation6], 0
    %11 = vsyncpa [#allocation4], 0
    // Predicated region
    $region2: #{tpu_custom_call.1} parent=1 // pred_check
      _
    $region3: #{tpu_custom_call.1} parent=1 // pred_check_branch
      %13 = sbr.rel (0) target = $region5
    $region4: #{tpu_custom_call.1} parent=1 // pred_region
      %15 = vsyncadd [#allocation3], 0
      %s16 = sshll.u32 %s0, 4
      %s17 = int_to_ptr.hbm [resolvable:$true] %s16
      %s18 = sshll.u32 [#allocation2], 4
      %s19 = int_to_ptr.vmem [resolvable:$true] %s18
      %24 = dma.hbm_to_vmem [thread:$0]  %s17, 128, %s19, [#allocation3], 64, 64, 4
    $region5: #{tpu_custom_call.1} parent=1 // pred_fallthru
      _
    // Predicated region
    $region6: #{tpu_custom_call.1} parent=1 // pred_check
      _
    $region7: #{tpu_custom_call.1} parent=1 // pred_check_branch
      %26 = sbr.rel (0) target = $region9
    $region8: #{tpu_custom_call.1} parent=1 // pred_region
      %28 = vsyncadd [#allocation6], 0
      %s29 = sshll.u32 %s1, 4
      %s30 = int_to_ptr.hbm [resolvable:$true] %s29
      %s31 = sshll.u32 [#allocation5], 4
      %s32 = int_to_ptr.vmem [resolvable:$true] %s31
      %37 = dma.hbm_to_vmem [thread:$0]  %s30, 128, %s32, [#allocation6], 64, 64, 4
    $region9: #{tpu_custom_call.1} parent=1 // pred_fallthru
      _
    // Predicated region
    $region10: #{tpu_custom_call.1} parent=1 // pred_check
      _
    $region11: #{tpu_custom_call.1} parent=1 // pred_check_branch
      %39 = sbr.rel (0) target = $region13
    $region12: #{tpu_custom_call.1} parent=1 // pred_region
      _
    $region13: #{tpu_custom_call.1} parent=1 // pred_fallthru
      _
    // Predicated region
    $region14: #{tpu_custom_call.1} parent=1 // pred_check
      _
    $region15: #{tpu_custom_call.1} parent=1 // pred_check_branch
      %41 = sbr.rel (0) target = $region17
    $region16: #{tpu_custom_call.1} parent=1 // pred_region
      _
    $region17: #{tpu_custom_call.1} parent=1 // pred_fallthru
      _
    // Predicated region
    $region18: #{tpu_custom_call.1} parent=1 // pred_check
      _
    $region19: #{tpu_custom_call.1} parent=1 // pred_check_branch
      %43 = sbr.rel (0) target = $region21
    $region20: #{tpu_custom_call.1} parent=1 // pred_region
      %45 = dma.done [#allocation3], 128
    $region21: #{tpu_custom_call.1} parent=1 // pred_fallthru
      _
    // Predicated region
    $region22: #{tpu_custom_call.1} parent=1 // pred_check
      _
    $region23: #{tpu_custom_call.1} parent=1 // pred_check_branch
      %47 = sbr.rel (0) target = $region25
    $region24: #{tpu_custom_call.1} parent=1 // pred_region
      %49 = dma.done [#allocation6], 128
    $region25: #{tpu_custom_call.1} parent=1 // pred_fallthru
      _
    %v50 = vld [vmem:[#allocation2] sm:$0xf]
    %v51 = vld [vmem:[#allocation2 + $0x4] sm:$0xf]
    %v52 = vunpack.c.l.bf16 %v50
    %v53 = vunpack.c.l.bf16 %v51
    %v54 = vld [vmem:[#allocation5] sm:$0xf]
    %v55 = vld [vmem:[#allocation5 + $0x4] sm:$0xf]
    %v56 = vunpack.c.l.bf16 %v54
    %v57 = vunpack.c.l.bf16 %v55
    %v58 = vadd.f32 %v52, %v56
    %v59 = vadd.f32 %v53, %v57
    %v60 = vld [vmem:[%s2] sm:$0x1]
    %v61 = vld [vmem:[%s3] sm:$0x1]
    %vm62 = vcmask 261120
    %v63 = vsel %vm62, %v58, 0.0
    %64 = vadd.xlane.f32.xlu0 %v63
    %v65 = vpop.xlane.xlu0 %64
    %v66 = vsel %vm62, %v59, 0.0
    %67 = vadd.xlane.f32.xlu0 %v66
    %v68 = vpop.xlane.xlu0 %67
    %v69 = vrcp.pop 32.0
    %v70 = vmul.f32 32.0, %v69
    %v71 = vsub.f32 1.0, %v70
    %v72 = vmul.f32 %v69, %v71
    %v73 = vadd.f32 %v69, %v72
    %vm74 = vweird.f32 %v69
    %v75 = vsel %vm74, %v69, %v73
    %v76 = vmul.f32 %v65, %v75
    %v77 = vmul.f32 %v68, %v75
    %v78 = vsub.f32 %v58, %v76
    %v79 = vsub.f32 %v59, %v77
    %v80 = vmul.f32 %v78, %v78
    %v81 = vmul.f32 %v79, %v79
    %v82 = vsel %vm62, %v80, 0.0
    %83 = vadd.xlane.f32.xlu0 %v82
    %v84 = vpop.xlane.xlu0 %83
    %v85 = vsel %vm62, %v81, 0.0
    %86 = vadd.xlane.f32.xlu0 %v85
    %v87 = vpop.xlane.xlu0 %86
    %v88 = vmul.f32 %v84, %v75
    %v89 = vmul.f32 %v87, %v75
    %v90 = vadd.f32 %v88, 1e-12
    %v91 = vadd.f32 %v89, 1e-12
    %v92 = vrsqrt.pop %v90
    %v93 = vmul.f32 %v92, %v90
    %v94 = vmul.f32 %v93, %v92
    %v95 = vmul.f32 0.5, %v94
    %v96 = vsub.f32 1.5, %v95
    %v97 = vmul.f32 %v92, %v96
    %vm98 = vweird.f32 %v90
    %vm99 = vweird.f32 %v92
    %vm100 = vmor %vm98, %vm99
    %v101 = vsel %vm100, %v92, %v97
    %v102 = vrsqrt.pop %v91
    %v103 = vmul.f32 %v102, %v91
    %v104 = vmul.f32 %v103, %v102
    %v105 = vmul.f32 0.5, %v104
    %v106 = vsub.f32 1.5, %v105
    %v107 = vmul.f32 %v102, %v106
    %vm108 = vweird.f32 %v91
    %vm109 = vweird.f32 %v102
    %vm110 = vmor %vm108, %vm109
    %v111 = vsel %vm110, %v102, %v107
    %v112 = vmul.f32 %v78, %v101
    %v113 = vmul.f32 %v79, %v111
    %v115 = vperm.slane %v60, 0
    %v117 = vmul.f32 %v112, %v115
    %v118 = vmul.f32 %v113, %v115
    %v120 = vperm.slane %v61, 0
    %v122 = vadd.f32 %v117, %v120
    %v123 = vadd.f32 %v118, %v120
    %v124 = vpack.c.bf16 %v122, %v122
    %v125 = vpack.c.bf16 %v123, %v123
    %vm126 = vcmask 257024
    %127 = vst.msk [vmem:[#allocation7] sm:$0xf] %vm126, %v124
    %128 = vst.msk [vmem:[#allocation7 + $0x4] sm:$0xf] %vm126, %v125
    // Predicated region
    $region26: #{tpu_custom_call.1} parent=1 // pred_check
      _
    $region27: #{tpu_custom_call.1} parent=1 // pred_check_branch
      %130 = sbr.rel (0) target = $region29
    $region28: #{tpu_custom_call.1} parent=1 // pred_region
      %132 = vsyncadd [#allocation4], 0
      %s133 = sshll.u32 [#allocation7], 4
      %s134 = int_to_ptr.vmem [resolvable:$true] %s133
      %s135 = sshll.u32 %s4, 4
      %s136 = int_to_ptr.hbm [resolvable:$true] %s135
      %141 = dma.vmem_to_hbm [thread:$0]  %s134, 128, %s136, [#allocation4], 64, 64, 4
    $region29: #{tpu_custom_call.1} parent=1 // pred_fallthru
      _
    // Predicated region
    $region30: #{tpu_custom_call.1} parent=1 // pred_check
      _
    $region31: #{tpu_custom_call.1} parent=1 // pred_check_branch
      %143 = sbr.rel (0) target = $region33
    $region32: #{tpu_custom_call.1} parent=1 // pred_region
      %145 = dma.done [#allocation4], 128
    $region33: #{tpu_custom_call.1} parent=1 // pred_fallthru
      _
    %146 = vsyncpa [#allocation3], 1
    %147 = vsyncpa [#allocation6], 1
    %148 = vsyncpa [#allocation4], 1

</llo_original>
